<compile_context>
chip_gen: v6e
topology: v6e:2x2x1
jax: 0.10.0
libtpu: 0.0.40
codegen_flags: <defaults>
</compile_context>

<pallas_src>
import math
import functools

import jax
import jax.numpy as jnp
from jax import lax
from jax.experimental import pallas as pl
from jax.experimental.pallas import tpu as pltpu


# ---------------------------------------------------------------------------
# VMEM sizing (generation-aware: v5e/v6e have 128 MiB, v7x only 64 MiB)
# ---------------------------------------------------------------------------

def _vmem_capacity_bytes() -> int:
    try:
        cap = int(getattr(pltpu.get_tpu_info(), "vmem_capacity_bytes"))
        if cap > 0:
            return cap
    except Exception:
        pass
    return 64 * 1024 * 1024          # assume the smallest (v7x) if unknown


def _vmem_limit_bytes() -> int:
    # ~50% of physical VMEM, capped at 48 MiB: 48 MiB on v5e/v6e (128 MiB),
    # ~32 MiB on v7x (64 MiB) so double-buffered blocks + f32 temps fit.
    return min(_vmem_capacity_bytes() // 2, 48 * 1024 * 1024)


def _choose_block_rows(r: int, n: int, *, copies: int, cap: int) -> int:
    """Rows per grid step: multiple of 8, sized so `copies` live (RB, N) f32
    slabs (double-buffered in/out + in-kernel temporaries) fit comfortably
    under the scoped VMEM limit.  Per-kernel `copies` lets the memory-bound
    minmax kernel take much larger tiles than the percentile kernel."""
    if r <= 8:
        return r                      # block second-to-last == full dim: legal
    budget = (_vmem_limit_bytes() * 2) // 3
    rb = budget // (copies * n * 4)
    rb = max(8, (rb // 8) * 8)
    rb = min(rb, cap)
    rb = min(rb, (r // 8) * 8)        # never exceed the row count; edge block
    return rb                         # (non-divisible grid) handles the tail


def _global_rows(n: int) -> int:
    """Row count for the global-reduction (3-D) path: power-of-two divisor of
    n keeping >=128 lanes per row, so vregs are fully populated."""
    r = 1
    while (r * 2) <= 256 and n % (r * 2) == 0 and (n // (r * 2)) >= 128:
        r *= 2
    return r


# ---------------------------------------------------------------------------
# In-kernel helpers
# ---------------------------------------------------------------------------

def _refined_reciprocal(d):
    """EUP approx reciprocal + 2 Newton steps (per-row scalars, ~f32 exact)."""
    inv = pl.reciprocal(d, approx=True)
    inv = inv * (2.0 - d * inv)
    inv = inv * (2.0 - d * inv)
    return inv


def _select_two_tails(x, k_lo_f, k_lo_c, r_hi_f, r_hi_c, num_iters, axes):
    """Store-free threshold-carry selection of two order statistics per tail.

    x: f32 block, READ-ONLY (never mutated -> no vector stores in the loop).
    Returns (v_lo_f, v_lo_c, v_hi_f, v_hi_c), each reduced over `axes` with
    keepdims.  Lo values are the k_lo_f / k_lo_c-th smallest, hi values the
    r_hi_f / r_hi_c-th largest (0-indexed, counting duplicates).  Each
    iteration advances to the next distinct value above/below the carried
    threshold and consumes all of its duplicates at once (tie-safe), so the
    needed rank is covered within rank+1 iterations.  Both tails share the
    single x load per vreg inside one fused loop.
    """
    axes = tuple(a % x.ndim for a in axes)
    red_shape = tuple(1 if i in axes else d for i, d in enumerate(x.shape))
    pos_inf = jnp.float32(jnp.inf)
    neg_inf = jnp.float32(-jnp.inf)

    def rmin(a):
        return jnp.min(a, axis=axes, keepdims=True)

    def rmax(a):
        return jnp.max(a, axis=axes, keepdims=True)

    def rcount(mask):
        return jnp.sum(mask.astype(jnp.int32), axis=axes, keepdims=True)

    def body(_, carry):
        (thr_lo, cons_lo, v_lf, v_lc,
         thr_hi, cons_hi, v_hf, v_hc) = carry

        # --- low tail: next distinct value above thr_lo (ascending) --------
        # (cons == 0) re-includes everything on the first pass so -inf inputs
        # are still counted correctly.
        take_lo = (x > thr_lo) | (cons_lo == 0)
        m_lo = rmin(jnp.where(take_lo, x, pos_inf))
        up_lo = cons_lo + rcount(x == m_lo)
        v_lf = jnp.where((cons_lo <= k_lo_f) & (k_lo_f < up_lo), m_lo, v_lf)
        v_lc = jnp.where((cons_lo <= k_lo_c) & (k_lo_c < up_lo), m_lo, v_lc)

        # --- high tail: next distinct value below thr_hi (descending) ------
        take_hi = (x < thr_hi) | (cons_hi == 0)
        m_hi = rmax(jnp.where(take_hi, x, neg_inf))
        up_hi = cons_hi + rcount(x == m_hi)
        v_hf = jnp.where((cons_hi <= r_hi_f) & (r_hi_f < up_hi), m_hi, v_hf)
        v_hc = jnp.where((cons_hi <= r_hi_c) & (r_hi_c < up_hi), m_hi, v_hc)

        return (m_lo, up_lo, v_lf, v_lc, m_hi, up_hi, v_hf, v_hc)

    zf = jnp.zeros(red_shape, jnp.float32)
    zi = jnp.zeros(red_shape, jnp.int32)
    init = (jnp.full(red_shape, neg_inf, jnp.float32), zi, zf, zf,
            jnp.full(red_shape, pos_inf, jnp.float32), zi, zf, zf)

    # Fully unroll short loops; unroll=2 otherwise so the tie-count reduce of
    # iteration i (off the min/max chain) can overlap iteration i+1's reduce.
    unroll = True if num_iters <= 8 else 2
    (_, _, v_lf, v_lc, _, _, v_hf, v_hc) = lax.fori_loop(
        0, num_iters, body, init, unroll=unroll)
    return v_lf, v_lc, v_hf, v_hc


# ---------------------------------------------------------------------------
# Kernels
# ---------------------------------------------------------------------------

def _percentile_norm_kernel(x_ref, o_ref, *,
                            k_lo_f, k_lo_c, frac_lo,
                            r_hi_f, r_hi_c, frac_hi,
                            num_iters, axes):
    """Per-row (axes=(1,)) or global (axes=(0,1)) percentile clamp+normalize."""
    x = x_ref[...].astype(jnp.float32)

    v_lf, v_lc, v_hf, v_hc = _select_two_tails(
        x, k_lo_f, k_lo_c, r_hi_f, r_hi_c, num_iters, axes)

    # torch.quantile 'linear' interpolation between floor/ceil order stats.
    p_low = v_lf + jnp.float32(frac_lo) * (v_lc - v_lf)
    p_high = v_hf + jnp.float32(frac_hi) * (v_hc - v_hf)

    clamped = jnp.clip(x, p_low, p_high)
    inv = _refined_reciprocal(p_high - p_low + jnp.float32(1e-8))   # EUP slot
    o_ref[...] = ((clamped - p_low) * inv).astype(o_ref.dtype)


def _minmax_norm_kernel(x_ref, o_ref, *, axes):
    """Per-row or global min/max normalize."""
    x = x_ref[...].astype(jnp.float32)
    x_min = jnp.min(x, axis=axes, keepdims=True)
    x_max = jnp.max(x, axis=axes, keepdims=True)
    inv = _refined_reciprocal(x_max - x_min + jnp.float32(1e-8))
    o_ref[...] = ((x - x_min) * inv).astype(o_ref.dtype)


# ---------------------------------------------------------------------------
# pallas_call wrapper
# ---------------------------------------------------------------------------

def _rows_pallas_call(kernel_fn, x2d: jax.Array, *, copies: int, rb_cap: int,
                      global_reduce: bool) -> jax.Array:
    r, n = x2d.shape
    if global_reduce:
        rb = r                 # one block == full array (reduction spans rows)
    else:
        rb = _choose_block_rows(r, n, copies=copies, cap=rb_cap)

    # No jnp.pad / out[:r] round-trip: grid = cdiv(r, rb); Pallas masks the
    # edge block (rows are independent, so tail garbage never contaminates
    # valid rows and its writes are dropped).
    grid = (pl.cdiv(r, rb),)

    # TODO(synk): lane-axis (N) tiling + two-stage merge for rows too large to
    # fit a full-row block in VMEM (very large 3-D inputs).
    return pl.pallas_call(
        kernel_fn,
        out_shape=jax.ShapeDtypeStruct((r, n), x2d.dtype),
        grid_spec=pltpu.PrefetchScalarGridSpec(
            num_scalar_prefetch=0,
            grid=grid,
            in_specs=[pl.BlockSpec((rb, n), lambda i: (i, 0))],
            out_specs=pl.BlockSpec((rb, n), lambda i: (i, 0)),
        ),
        compiler_params=pltpu.CompilerParams(
            # Rows are independent -> safe to shard the grid axis.
            # TODO(synk): switch to pltpu.CORE_PARALLEL when targeting v7x
            # (2 TCs/chip); "parallel" is portable and near-neutral elsewhere.
            dimension_semantics=("parallel",),
            vmem_limit_bytes=_vmem_limit_bytes(),
        ),
    )(x2d)


def _quantile_indices(n: int, q: float):
    """torch.quantile 'linear' interpolation: position q*(n-1)."""
    pos = q * (n - 1)
    k_f = int(math.floor(pos))
    k_c = min(int(math.ceil(pos)), n - 1)
    return k_f, k_c, float(pos - k_f)


def _percentile_rows(x2d: jax.Array, percentiles, *, global_reduce: bool):
    r, n_cols = x2d.shape
    n = r * n_cols if global_reduce else n_cols

    k_lo_f, k_lo_c, frac_lo = _quantile_indices(n, percentiles[0] / 100.0)
    k_hi_f, k_hi_c, frac_hi = _quantile_indices(n, percentiles[1] / 100.0)
    # High-side order statistics are extracted from the top of each row.
    r_hi_f = (n - 1) - k_hi_f
    r_hi_c = (n - 1) - k_hi_c
    # Each extraction consumes >= 1 rank; both tails fused into one loop.
    num_iters = max(k_lo_c, r_hi_f) + 1
    # TODO(synk): for very large N (>=16K/row) or mid-range percentiles use a
    # 24-32 pass bit-prefix (radix) select instead of O(0.01*N) extraction.

    kernel = functools.partial(
        _percentile_norm_kernel,
        k_lo_f=k_lo_f, k_lo_c=k_lo_c, frac_lo=frac_lo,
        r_hi_f=r_hi_f, r_hi_c=r_hi_c, frac_hi=frac_hi,
        num_iters=num_iters,
        axes=(0, 1) if global_reduce else (1,))
    return _rows_pallas_call(kernel, x2d, copies=8, rb_cap=1024,
                             global_reduce=global_reduce)


def _minmax_rows(x2d: jax.Array, *, global_reduce: bool):
    kernel = functools.partial(
        _minmax_norm_kernel, axes=(0, 1) if global_reduce else (1,))
    # minmax is memory-bound with a tiny working set -> bigger tiles.
    return _rows_pallas_call(kernel, x2d, copies=5, rb_cap=2048,
                             global_reduce=global_reduce)


# ---------------------------------------------------------------------------
# Module
# ---------------------------------------------------------------------------

class AdaptiveNormalization:
    """JAX/Pallas port of the PyTorch AdaptiveNormalization module."""

    def __init__(self, method: str = "percentile",
                 percentiles=(1, 99), quality_aware: bool = True):
        self.method = method
        self.percentiles = (float(percentiles[0]), float(percentiles[1]))
        self.quality_aware = quality_aware

    def __call__(self, x: jax.Array) -> jax.Array:
        if self.method == "percentile":
            if x.ndim == 3:
                n = int(x.size)
                r = _global_rows(n)
                out = _percentile_rows(x.reshape(r, n // r), self.percentiles,
                                       global_reduce=True)
                return out.reshape(x.shape)
            b, c, h, w = x.shape
            out = _percentile_rows(x.reshape(b * c, h * w), self.percentiles,
                                   global_reduce=False)
            return out.reshape(b, c, h, w)
        if self.method == "minmax":
            if x.ndim == 3:
                n = int(x.size)
                r = _global_rows(n)
                out = _minmax_rows(x.reshape(r, n // r), global_reduce=True)
                return out.reshape(x.shape)
            b = x.shape[0]
            out = _minmax_rows(x.reshape(b, -1), global_reduce=False)
            return out.reshape(x.shape)
        return x


# ---------------------------------------------------------------------------
# Pure-JAX references + self-test
# ---------------------------------------------------------------------------

def _ref_percentile_4d(x, percentiles):
    b, c, h, w = x.shape
    flat = x.reshape(b, c, -1)
    p_low = jnp.quantile(flat, percentiles[0] / 100.0, axis=2, keepdims=True)
    p_high = jnp.quantile(flat, percentiles[1] / 100.0, axis=2, keepdims=True)
    flat = jnp.clip(flat, p_low, p_high)
    flat = (flat - p_low) / (p_high - p_low + 1e-8)
    return flat.reshape(b, c, h, w)


def _ref_percentile_3d(x, percentiles):
    p_low = jnp.quantile(x, percentiles[0] / 100.0)
    p_high = jnp.quantile(x, percentiles[1] / 100.0)
    x = jnp.clip(x, p_low, p_high)
    return (x - p_low) / (p_high - p_low + 1e-8)


def _ref_minmax_4d(x):
    b = x.shape[0]
    x_min = x.reshape(b, -1).min(axis=1).reshape(-1, 1, 1, 1)
    x_max = x.reshape(b, -1).max(axis=1).reshape(-1, 1, 1, 1)
    return (x - x_min) / (x_max - x_min + 1e-8)


def _ref_minmax_3d(x):
    return (x - x.min()) / (x.max() - x.min() + 1e-8)


if __name__ == "__main__":
    key = jax.random.PRNGKey(0)
    k1, k2, k3 = jax.random.split(key, 3)

    model = AdaptiveNormalization(method="percentile", percentiles=(1, 99))
    mm = AdaptiveNormalization(method="minmax")

    # 4-D [B, C, H, W] percentile branch (per-(b,c) quantiles).
    x4 = jax.random.normal(k1, (2, 4, 16, 16), dtype=jnp.float32) * 3.0 + 1.0
    out4 = jax.block_until_ready(model(x4))
    ref4 = _ref_percentile_4d(x4, model.percentiles)
    assert out4.shape == x4.shape and out4.dtype == x4.dtype
    assert jnp.allclose(out4, ref4, atol=1e-4, rtol=1e-4), "4D percentile mismatch"

    # 4-D with row count not a multiple of the 8-row block (edge-block masking,
    # exercises the no-pad path).
    x4e = jax.random.normal(k3, (3, 5, 16, 16), dtype=jnp.float32) * 2.0 - 0.3
    out4e = jax.block_until_ready(model(x4e))
    ref4e = _ref_percentile_4d(x4e, model.percentiles)
    assert jnp.allclose(out4e, ref4e, atol=1e-4, rtol=1e-4), "edge-block mismatch"

    # 3-D [C, H, W] percentile branch (single global quantile).
    x3 = jax.random.normal(k2, (4, 16, 16), dtype=jnp.float32) * 2.0 - 0.5
    out3 = jax.block_until_ready(model(x3))
    ref3 = _ref_percentile_3d(x3, model.percentiles)
    assert jnp.allclose(out3, ref3, atol=1e-4, rtol=1e-4), "3D percentile mismatch"

    # 4-D minmax branch (per-batch min/max).
    outm = jax.block_until_ready(mm(x4))
    refm = _ref_minmax_4d(x4)
    assert jnp.allclose(outm, refm, atol=1e-4, rtol=1e-4), "4D minmax mismatch"

    # 3-D minmax branch (global min/max).
    outm3 = jax.block_until_ready(mm(x3))
    refm3 = _ref_minmax_3d(x3)
    assert jnp.allclose(outm3, refm3, atol=1e-4, rtol=1e-4), "3D minmax mismatch"

    print("KERNEL_OK")
</pallas_src>

<mosaic_0001>
module attributes {stable_mosaic.version = 11 : i64} {
  func.func @_percentile_norm_kernel(%arg0: i32, %arg1: memref<8x256xf32, #tpu.memory_space<vmem>>, %arg2: memref<8x256xf32, #tpu.memory_space<vmem>>) attributes {dimension_semantics = [#tpu.dimension_semantics<parallel>], iteration_bounds = array<i64: 1>, scalar_prefetch = 0 : i64, scratch_operands = 0 : i64, tpu.core_type = #tpu.core_type<tc>, window_params = [{transform_indices = @transform_0, window_bounds = array<i64: 8, 256>}, {transform_indices = @transform_1, window_bounds = array<i64: 8, 256>}]} {
    %c0 = arith.constant 0 : index
    %c0_0 = arith.constant 0 : index
    %0 = vector.load %arg1[%c0, %c0_0] : memref<8x256xf32, #tpu.memory_space<vmem>>, vector<8x256xf32>
    %cst = arith.constant 0.000000e+00 : f32
    %1 = vector.broadcast %cst : f32 to vector<8x1xf32>
    %c0_i32 = arith.constant 0 : i32
    %2 = vector.broadcast %c0_i32 : i32 to vector<8x1xi32>
    %cst_1 = arith.constant 0xFF800000 : f32
    %3 = vector.broadcast %cst_1 : f32 to vector<8x1xf32>
    %cst_2 = arith.constant 0x7F800000 : f32
    %4 = vector.broadcast %cst_2 : f32 to vector<8x1xf32>
    %cst_3 = arith.constant 0x7F800000 : f32
    %cst_4 = arith.constant 0xFF800000 : f32
    %c0_i32_5 = arith.constant 0 : i32
    %5 = vector.broadcast %3 : vector<8x1xf32> to vector<8x256xf32>
    %6 = arith.cmpf ogt, %0, %5 : vector<8x256xf32>
    %c0_i32_6 = arith.constant 0 : i32
    %7 = vector.broadcast %c0_i32_6 : i32 to vector<8x1xi32>
    %8 = arith.cmpi eq, %2, %7 : vector<8x1xi32>
    %9 = vector.broadcast %8 : vector<8x1xi1> to vector<8x256xi1>
    %10 = arith.ori %6, %9 : vector<8x256xi1>
    %11 = vector.broadcast %cst_3 : f32 to vector<8x256xf32>
    %12 = arith.select %10, %0, %11 : vector<8x256xi1>, vector<8x256xf32>
    %cst_7 = arith.constant dense<0x7F800000> : vector<8xf32>
    %13 = vector.multi_reduction <minimumf>, %12, %cst_7 [1] : vector<8x256xf32> to vector<8xf32>
    %14 = vector.shape_cast %13 : vector<8xf32> to vector<8x1xf32>
    %15 = vector.broadcast %14 : vector<8x1xf32> to vector<8x256xf32>
    %16 = arith.cmpf oeq, %0, %15 : vector<8x256xf32>
    %17 = arith.extui %16 : vector<8x256xi1> to vector<8x256xi32>
    %cst_8 = arith.constant dense<0> : vector<8xi32>
    %18 = vector.multi_reduction <add>, %17, %cst_8 [1] : vector<8x256xi32> to vector<8xi32>
    %19 = vector.shape_cast %18 : vector<8xi32> to vector<8x1xi32>
    %20 = arith.addi %2, %19 : vector<8x1xi32>
    %c2_i32 = arith.constant 2 : i32
    %21 = vector.broadcast %c2_i32 : i32 to vector<8x1xi32>
    %22 = arith.cmpi sle, %2, %21 : vector<8x1xi32>
    %c2_i32_9 = arith.constant 2 : i32
    %23 = vector.broadcast %c2_i32_9 : i32 to vector<8x1xi32>
    %24 = arith.cmpi sgt, %20, %23 : vector<8x1xi32>
    %25 = arith.andi %22, %24 : vector<8x1xi1>
    %26 = arith.select %25, %14, %1 : vector<8x1xi1>, vector<8x1xf32>
    %c3_i32 = arith.constant 3 : i32
    %27 = vector.broadcast %c3_i32 : i32 to vector<8x1xi32>
    %28 = arith.cmpi sle, %2, %27 : vector<8x1xi32>
    %c3_i32_10 = arith.constant 3 : i32
    %29 = vector.broadcast %c3_i32_10 : i32 to vector<8x1xi32>
    %30 = arith.cmpi sgt, %20, %29 : vector<8x1xi32>
    %31 = arith.andi %28, %30 : vector<8x1xi1>
    %32 = arith.select %31, %14, %1 : vector<8x1xi1>, vector<8x1xf32>
    %33 = vector.broadcast %4 : vector<8x1xf32> to vector<8x256xf32>
    %34 = arith.cmpf olt, %0, %33 : vector<8x256xf32>
    %c0_i32_11 = arith.constant 0 : i32
    %35 = vector.broadcast %c0_i32_11 : i32 to vector<8x1xi32>
    %36 = arith.cmpi eq, %2, %35 : vector<8x1xi32>
    %37 = vector.broadcast %36 : vector<8x1xi1> to vector<8x256xi1>
    %38 = arith.ori %34, %37 : vector<8x256xi1>
    %39 = vector.broadcast %cst_4 : f32 to vector<8x256xf32>
    %40 = arith.select %38, %0, %39 : vector<8x256xi1>, vector<8x256xf32>
    %cst_12 = arith.constant dense<0xFF800000> : vector<8xf32>
    %41 = vector.multi_reduction <maximumf>, %40, %cst_12 [1] : vector<8x256xf32> to vector<8xf32>
    %42 = vector.shape_cast %41 : vector<8xf32> to vector<8x1xf32>
    %43 = vector.broadcast %42 : vector<8x1xf32> to vector<8x256xf32>
    %44 = arith.cmpf oeq, %0, %43 : vector<8x256xf32>
    %45 = arith.extui %44 : vector<8x256xi1> to vector<8x256xi32>
    %cst_13 = arith.constant dense<0> : vector<8xi32>
    %46 = vector.multi_reduction <add>, %45, %cst_13 [1] : vector<8x256xi32> to vector<8xi32>
    %47 = vector.shape_cast %46 : vector<8xi32> to vector<8x1xi32>
    %48 = arith.addi %2, %47 : vector<8x1xi32>
    %c3_i32_14 = arith.constant 3 : i32
    %49 = vector.broadcast %c3_i32_14 : i32 to vector<8x1xi32>
    %50 = arith.cmpi sle, %2, %49 : vector<8x1xi32>
    %c3_i32_15 = arith.constant 3 : i32
    %51 = vector.broadcast %c3_i32_15 : i32 to vector<8x1xi32>
    %52 = arith.cmpi sgt, %48, %51 : vector<8x1xi32>
    %53 = arith.andi %50, %52 : vector<8x1xi1>
    %54 = arith.select %53, %42, %1 : vector<8x1xi1>, vector<8x1xf32>
    %c2_i32_16 = arith.constant 2 : i32
    %55 = vector.broadcast %c2_i32_16 : i32 to vector<8x1xi32>
    %56 = arith.cmpi sle, %2, %55 : vector<8x1xi32>
    %c2_i32_17 = arith.constant 2 : i32
    %57 = vector.broadcast %c2_i32_17 : i32 to vector<8x1xi32>
    %58 = arith.cmpi sgt, %48, %57 : vector<8x1xi32>
    %59 = arith.andi %56, %58 : vector<8x1xi1>
    %60 = arith.select %59, %42, %1 : vector<8x1xi1>, vector<8x1xf32>
    %c1_i32 = arith.constant 1 : i32
    %61 = vector.broadcast %14 : vector<8x1xf32> to vector<8x256xf32>
    %62 = arith.cmpf ogt, %0, %61 : vector<8x256xf32>
    %c0_i32_18 = arith.constant 0 : i32
    %63 = vector.broadcast %c0_i32_18 : i32 to vector<8x1xi32>
    %64 = arith.cmpi eq, %20, %63 : vector<8x1xi32>
    %65 = vector.broadcast %64 : vector<8x1xi1> to vector<8x256xi1>
    %66 = arith.ori %62, %65 : vector<8x256xi1>
    %67 = vector.broadcast %cst_3 : f32 to vector<8x256xf32>
    %68 = arith.select %66, %0, %67 : vector<8x256xi1>, vector<8x256xf32>
    %cst_19 = arith.constant dense<0x7F800000> : vector<8xf32>
    %69 = vector.multi_reduction <minimumf>, %68, %cst_19 [1] : vector<8x256xf32> to vector<8xf32>
    %70 = vector.shape_cast %69 : vector<8xf32> to vector<8x1xf32>
    %71 = vector.broadcast %70 : vector<8x1xf32> to vector<8x256xf32>
    %72 = arith.cmpf oeq, %0, %71 : vector<8x256xf32>
    %73 = arith.extui %72 : vector<8x256xi1> to vector<8x256xi32>
    %cst_20 = arith.constant dense<0> : vector<8xi32>
    %74 = vector.multi_reduction <add>, %73, %cst_20 [1] : vector<8x256xi32> to vector<8xi32>
    %75 = vector.shape_cast %74 : vector<8xi32> to vector<8x1xi32>
    %76 = arith.addi %20, %75 : vector<8x1xi32>
    %c2_i32_21 = arith.constant 2 : i32
    %77 = vector.broadcast %c2_i32_21 : i32 to vector<8x1xi32>
    %78 = arith.cmpi sle, %20, %77 : vector<8x1xi32>
    %c2_i32_22 = arith.constant 2 : i32
    %79 = vector.broadcast %c2_i32_22 : i32 to vector<8x1xi32>
    %80 = arith.cmpi sgt, %76, %79 : vector<8x1xi32>
    %81 = arith.andi %78, %80 : vector<8x1xi1>
    %82 = arith.select %81, %70, %26 : vector<8x1xi1>, vector<8x1xf32>
    %c3_i32_23 = arith.constant 3 : i32
    %83 = vector.broadcast %c3_i32_23 : i32 to vector<8x1xi32>
    %84 = arith.cmpi sle, %20, %83 : vector<8x1xi32>
    %c3_i32_24 = arith.constant 3 : i32
    %85 = vector.broadcast %c3_i32_24 : i32 to vector<8x1xi32>
    %86 = arith.cmpi sgt, %76, %85 : vector<8x1xi32>
    %87 = arith.andi %84, %86 : vector<8x1xi1>
    %88 = arith.select %87, %70, %32 : vector<8x1xi1>, vector<8x1xf32>
    %89 = vector.broadcast %42 : vector<8x1xf32> to vector<8x256xf32>
    %90 = arith.cmpf olt, %0, %89 : vector<8x256xf32>
    %c0_i32_25 = arith.constant 0 : i32
    %91 = vector.broadcast %c0_i32_25 : i32 to vector<8x1xi32>
    %92 = arith.cmpi eq, %48, %91 : vector<8x1xi32>
    %93 = vector.broadcast %92 : vector<8x1xi1> to vector<8x256xi1>
    %94 = arith.ori %90, %93 : vector<8x256xi1>
    %95 = vector.broadcast %cst_4 : f32 to vector<8x256xf32>
    %96 = arith.select %94, %0, %95 : vector<8x256xi1>, vector<8x256xf32>
    %cst_26 = arith.constant dense<0xFF800000> : vector<8xf32>
    %97 = vector.multi_reduction <maximumf>, %96, %cst_26 [1] : vector<8x256xf32> to vector<8xf32>
    %98 = vector.shape_cast %97 : vector<8xf32> to vector<8x1xf32>
    %99 = vector.broadcast %98 : vector<8x1xf32> to vector<8x256xf32>
    %100 = arith.cmpf oeq, %0, %99 : vector<8x256xf32>
    %101 = arith.extui %100 : vector<8x256xi1> to vector<8x256xi32>
    %cst_27 = arith.constant dense<0> : vector<8xi32>
    %102 = vector.multi_reduction <add>, %101, %cst_27 [1] : vector<8x256xi32> to vector<8xi32>
    %103 = vector.shape_cast %102 : vector<8xi32> to vector<8x1xi32>
    %104 = arith.addi %48, %103 : vector<8x1xi32>
    %c3_i32_28 = arith.constant 3 : i32
    %105 = vector.broadcast %c3_i32_28 : i32 to vector<8x1xi32>
    %106 = arith.cmpi sle, %48, %105 : vector<8x1xi32>
    %c3_i32_29 = arith.constant 3 : i32
    %107 = vector.broadcast %c3_i32_29 : i32 to vector<8x1xi32>
    %108 = arith.cmpi sgt, %104, %107 : vector<8x1xi32>
    %109 = arith.andi %106, %108 : vector<8x1xi1>
    %110 = arith.select %109, %98, %54 : vector<8x1xi1>, vector<8x1xf32>
    %c2_i32_30 = arith.constant 2 : i32
    %111 = vector.broadcast %c2_i32_30 : i32 to vector<8x1xi32>
    %112 = arith.cmpi sle, %48, %111 : vector<8x1xi32>
    %c2_i32_31 = arith.constant 2 : i32
    %113 = vector.broadcast %c2_i32_31 : i32 to vector<8x1xi32>
    %114 = arith.cmpi sgt, %104, %113 : vector<8x1xi32>
    %115 = arith.andi %112, %114 : vector<8x1xi1>
    %116 = arith.select %115, %98, %60 : vector<8x1xi1>, vector<8x1xf32>
    %c2_i32_32 = arith.constant 2 : i32
    %117 = vector.broadcast %70 : vector<8x1xf32> to vector<8x256xf32>
    %118 = arith.cmpf ogt, %0, %117 : vector<8x256xf32>
    %c0_i32_33 = arith.constant 0 : i32
    %119 = vector.broadcast %c0_i32_33 : i32 to vector<8x1xi32>
    %120 = arith.cmpi eq, %76, %119 : vector<8x1xi32>
    %121 = vector.broadcast %120 : vector<8x1xi1> to vector<8x256xi1>
    %122 = arith.ori %118, %121 : vector<8x256xi1>
    %123 = vector.broadcast %cst_3 : f32 to vector<8x256xf32>
    %124 = arith.select %122, %0, %123 : vector<8x256xi1>, vector<8x256xf32>
    %cst_34 = arith.constant dense<0x7F800000> : vector<8xf32>
    %125 = vector.multi_reduction <minimumf>, %124, %cst_34 [1] : vector<8x256xf32> to vector<8xf32>
    %126 = vector.shape_cast %125 : vector<8xf32> to vector<8x1xf32>
    %127 = vector.broadcast %126 : vector<8x1xf32> to vector<8x256xf32>
    %128 = arith.cmpf oeq, %0, %127 : vector<8x256xf32>
    %129 = arith.extui %128 : vector<8x256xi1> to vector<8x256xi32>
    %cst_35 = arith.constant dense<0> : vector<8xi32>
    %130 = vector.multi_reduction <add>, %129, %cst_35 [1] : vector<8x256xi32> to vector<8xi32>
    %131 = vector.shape_cast %130 : vector<8xi32> to vector<8x1xi32>
    %132 = arith.addi %76, %131 : vector<8x1xi32>
    %c2_i32_36 = arith.constant 2 : i32
    %133 = vector.broadcast %c2_i32_36 : i32 to vector<8x1xi32>
    %134 = arith.cmpi sle, %76, %133 : vector<8x1xi32>
    %c2_i32_37 = arith.constant 2 : i32
    %135 = vector.broadcast %c2_i32_37 : i32 to vector<8x1xi32>
    %136 = arith.cmpi sgt, %132, %135 : vector<8x1xi32>
    %137 = arith.andi %134, %136 : vector<8x1xi1>
    %138 = arith.select %137, %126, %82 : vector<8x1xi1>, vector<8x1xf32>
    %c3_i32_38 = arith.constant 3 : i32
    %139 = vector.broadcast %c3_i32_38 : i32 to vector<8x1xi32>
    %140 = arith.cmpi sle, %76, %139 : vector<8x1xi32>
    %c3_i32_39 = arith.constant 3 : i32
    %141 = vector.broadcast %c3_i32_39 : i32 to vector<8x1xi32>
    %142 = arith.cmpi sgt, %132, %141 : vector<8x1xi32>
    %143 = arith.andi %140, %142 : vector<8x1xi1>
    %144 = arith.select %143, %126, %88 : vector<8x1xi1>, vector<8x1xf32>
    %145 = vector.broadcast %98 : vector<8x1xf32> to vector<8x256xf32>
    %146 = arith.cmpf olt, %0, %145 : vector<8x256xf32>
    %c0_i32_40 = arith.constant 0 : i32
    %147 = vector.broadcast %c0_i32_40 : i32 to vector<8x1xi32>
    %148 = arith.cmpi eq, %104, %147 : vector<8x1xi32>
    %149 = vector.broadcast %148 : vector<8x1xi1> to vector<8x256xi1>
    %150 = arith.ori %146, %149 : vector<8x256xi1>
    %151 = vector.broadcast %cst_4 : f32 to vector<8x256xf32>
    %152 = arith.select %150, %0, %151 : vector<8x256xi1>, vector<8x256xf32>
    %cst_41 = arith.constant dense<0xFF800000> : vector<8xf32>
    %153 = vector.multi_reduction <maximumf>, %152, %cst_41 [1] : vector<8x256xf32> to vector<8xf32>
    %154 = vector.shape_cast %153 : vector<8xf32> to vector<8x1xf32>
    %155 = vector.broadcast %154 : vector<8x1xf32> to vector<8x256xf32>
    %156 = arith.cmpf oeq, %0, %155 : vector<8x256xf32>
    %157 = arith.extui %156 : vector<8x256xi1> to vector<8x256xi32>
    %cst_42 = arith.constant dense<0> : vector<8xi32>
    %158 = vector.multi_reduction <add>, %157, %cst_42 [1] : vector<8x256xi32> to vector<8xi32>
    %159 = vector.shape_cast %158 : vector<8xi32> to vector<8x1xi32>
    %160 = arith.addi %104, %159 : vector<8x1xi32>
    %c3_i32_43 = arith.constant 3 : i32
    %161 = vector.broadcast %c3_i32_43 : i32 to vector<8x1xi32>
    %162 = arith.cmpi sle, %104, %161 : vector<8x1xi32>
    %c3_i32_44 = arith.constant 3 : i32
    %163 = vector.broadcast %c3_i32_44 : i32 to vector<8x1xi32>
    %164 = arith.cmpi sgt, %160, %163 : vector<8x1xi32>
    %165 = arith.andi %162, %164 : vector<8x1xi1>
    %166 = arith.select %165, %154, %110 : vector<8x1xi1>, vector<8x1xf32>
    %c2_i32_45 = arith.constant 2 : i32
    %167 = vector.broadcast %c2_i32_45 : i32 to vector<8x1xi32>
    %168 = arith.cmpi sle, %104, %167 : vector<8x1xi32>
    %c2_i32_46 = arith.constant 2 : i32
    %169 = vector.broadcast %c2_i32_46 : i32 to vector<8x1xi32>
    %170 = arith.cmpi sgt, %160, %169 : vector<8x1xi32>
    %171 = arith.andi %168, %170 : vector<8x1xi1>
    %172 = arith.select %171, %154, %116 : vector<8x1xi1>, vector<8x1xf32>
    %c3_i32_47 = arith.constant 3 : i32
    %173 = vector.broadcast %126 : vector<8x1xf32> to vector<8x256xf32>
    %174 = arith.cmpf ogt, %0, %173 : vector<8x256xf32>
    %c0_i32_48 = arith.constant 0 : i32
    %175 = vector.broadcast %c0_i32_48 : i32 to vector<8x1xi32>
    %176 = arith.cmpi eq, %132, %175 : vector<8x1xi32>
    %177 = vector.broadcast %176 : vector<8x1xi1> to vector<8x256xi1>
    %178 = arith.ori %174, %177 : vector<8x256xi1>
    %179 = vector.broadcast %cst_3 : f32 to vector<8x256xf32>
    %180 = arith.select %178, %0, %179 : vector<8x256xi1>, vector<8x256xf32>
    %cst_49 = arith.constant dense<0x7F800000> : vector<8xf32>
    %181 = vector.multi_reduction <minimumf>, %180, %cst_49 [1] : vector<8x256xf32> to vector<8xf32>
    %182 = vector.shape_cast %181 : vector<8xf32> to vector<8x1xf32>
    %183 = vector.broadcast %182 : vector<8x1xf32> to vector<8x256xf32>
    %184 = arith.cmpf oeq, %0, %183 : vector<8x256xf32>
    %185 = arith.extui %184 : vector<8x256xi1> to vector<8x256xi32>
    %cst_50 = arith.constant dense<0> : vector<8xi32>
    %186 = vector.multi_reduction <add>, %185, %cst_50 [1] : vector<8x256xi32> to vector<8xi32>
    %187 = vector.shape_cast %186 : vector<8xi32> to vector<8x1xi32>
    %188 = arith.addi %132, %187 : vector<8x1xi32>
    %c2_i32_51 = arith.constant 2 : i32
    %189 = vector.broadcast %c2_i32_51 : i32 to vector<8x1xi32>
    %190 = arith.cmpi sle, %132, %189 : vector<8x1xi32>
    %c2_i32_52 = arith.constant 2 : i32
    %191 = vector.broadcast %c2_i32_52 : i32 to vector<8x1xi32>
    %192 = arith.cmpi sgt, %188, %191 : vector<8x1xi32>
    %193 = arith.andi %190, %192 : vector<8x1xi1>
    %194 = arith.select %193, %182, %138 : vector<8x1xi1>, vector<8x1xf32>
    %c3_i32_53 = arith.constant 3 : i32
    %195 = vector.broadcast %c3_i32_53 : i32 to vector<8x1xi32>
    %196 = arith.cmpi sle, %132, %195 : vector<8x1xi32>
    %c3_i32_54 = arith.constant 3 : i32
    %197 = vector.broadcast %c3_i32_54 : i32 to vector<8x1xi32>
    %198 = arith.cmpi sgt, %188, %197 : vector<8x1xi32>
    %199 = arith.andi %196, %198 : vector<8x1xi1>
    %200 = arith.select %199, %182, %144 : vector<8x1xi1>, vector<8x1xf32>
    %201 = vector.broadcast %154 : vector<8x1xf32> to vector<8x256xf32>
    %202 = arith.cmpf olt, %0, %201 : vector<8x256xf32>
    %c0_i32_55 = arith.constant 0 : i32
    %203 = vector.broadcast %c0_i32_55 : i32 to vector<8x1xi32>
    %204 = arith.cmpi eq, %160, %203 : vector<8x1xi32>
    %205 = vector.broadcast %204 : vector<8x1xi1> to vector<8x256xi1>
    %206 = arith.ori %202, %205 : vector<8x256xi1>
    %207 = vector.broadcast %cst_4 : f32 to vector<8x256xf32>
    %208 = arith.select %206, %0, %207 : vector<8x256xi1>, vector<8x256xf32>
    %cst_56 = arith.constant dense<0xFF800000> : vector<8xf32>
    %209 = vector.multi_reduction <maximumf>, %208, %cst_56 [1] : vector<8x256xf32> to vector<8xf32>
    %210 = vector.shape_cast %209 : vector<8xf32> to vector<8x1xf32>
    %211 = vector.broadcast %210 : vector<8x1xf32> to vector<8x256xf32>
    %212 = arith.cmpf oeq, %0, %211 : vector<8x256xf32>
    %213 = arith.extui %212 : vector<8x256xi1> to vector<8x256xi32>
    %cst_57 = arith.constant dense<0> : vector<8xi32>
    %214 = vector.multi_reduction <add>, %213, %cst_57 [1] : vector<8x256xi32> to vector<8xi32>
    %215 = vector.shape_cast %214 : vector<8xi32> to vector<8x1xi32>
    %216 = arith.addi %160, %215 : vector<8x1xi32>
    %c3_i32_58 = arith.constant 3 : i32
    %217 = vector.broadcast %c3_i32_58 : i32 to vector<8x1xi32>
    %218 = arith.cmpi sle, %160, %217 : vector<8x1xi32>
    %c3_i32_59 = arith.constant 3 : i32
    %219 = vector.broadcast %c3_i32_59 : i32 to vector<8x1xi32>
    %220 = arith.cmpi sgt, %216, %219 : vector<8x1xi32>
    %221 = arith.andi %218, %220 : vector<8x1xi1>
    %222 = arith.select %221, %210, %166 : vector<8x1xi1>, vector<8x1xf32>
    %c2_i32_60 = arith.constant 2 : i32
    %223 = vector.broadcast %c2_i32_60 : i32 to vector<8x1xi32>
    %224 = arith.cmpi sle, %160, %223 : vector<8x1xi32>
    %c2_i32_61 = arith.constant 2 : i32
    %225 = vector.broadcast %c2_i32_61 : i32 to vector<8x1xi32>
    %226 = arith.cmpi sgt, %216, %225 : vector<8x1xi32>
    %227 = arith.andi %224, %226 : vector<8x1xi1>
    %228 = arith.select %227, %210, %172 : vector<8x1xi1>, vector<8x1xf32>
    %229 = arith.subf %200, %194 : vector<8x1xf32>
    %cst_62 = arith.constant 5.500000e-01 : f32
    %230 = vector.broadcast %cst_62 : f32 to vector<8x1xf32>
    %231 = arith.mulf %230, %229 : vector<8x1xf32>
    %232 = arith.addf %194, %231 : vector<8x1xf32>
    %233 = arith.subf %228, %222 : vector<8x1xf32>
    %cst_63 = arith.constant 4.500000e-01 : f32
    %234 = vector.broadcast %cst_63 : f32 to vector<8x1xf32>
    %235 = arith.mulf %234, %233 : vector<8x1xf32>
    %236 = arith.addf %222, %235 : vector<8x1xf32>
    %237 = vector.broadcast %232 : vector<8x1xf32> to vector<8x256xf32>
    %238 = arith.maximumf %237, %0 : vector<8x256xf32>
    %239 = vector.broadcast %236 : vector<8x1xf32> to vector<8x256xf32>
    %240 = arith.minimumf %239, %238 : vector<8x256xf32>
    %241 = arith.subf %236, %232 : vector<8x1xf32>
    %cst_64 = arith.constant 9.99999993E-9 : f32
    %242 = vector.broadcast %cst_64 : f32 to vector<8x1xf32>
    %243 = arith.addf %241, %242 : vector<8x1xf32>
    %244 = tpu.reciprocal %243 {approx = true} : vector<8x1xf32> -> vector<8x1xf32>
    %245 = arith.mulf %243, %244 : vector<8x1xf32>
    %cst_65 = arith.constant 2.000000e+00 : f32
    %246 = vector.broadcast %cst_65 : f32 to vector<8x1xf32>
    %247 = arith.subf %246, %245 : vector<8x1xf32>
    %248 = arith.mulf %244, %247 : vector<8x1xf32>
    %249 = arith.mulf %243, %248 : vector<8x1xf32>
    %cst_66 = arith.constant 2.000000e+00 : f32
    %250 = vector.broadcast %cst_66 : f32 to vector<8x1xf32>
    %251 = arith.subf %250, %249 : vector<8x1xf32>
    %252 = arith.mulf %248, %251 : vector<8x1xf32>
    %253 = vector.broadcast %232 : vector<8x1xf32> to vector<8x256xf32>
    %254 = arith.subf %240, %253 : vector<8x256xf32>
    %255 = vector.broadcast %252 : vector<8x1xf32> to vector<8x256xf32>
    %256 = arith.mulf %254, %255 : vector<8x256xf32>
    %c0_67 = arith.constant 0 : index
    %c0_68 = arith.constant 0 : index
    %257 = vector.load %arg2[%c0_67, %c0_68] : memref<8x256xf32, #tpu.memory_space<vmem>>, vector<8x256xf32>
    tpu.vector_store %arg2[%c0_67, %c0_68], %256 {strides = array<i32>} : memref<8x256xf32, #tpu.memory_space<vmem>>, vector<8x256xf32>,
    return
  }
  func.func @transform_0(%arg0: i32) -> (i32, i32) {
    %c0_i32 = arith.constant 0 : i32
    %c0_i32_0 = arith.constant 0 : i32
    return %arg0, %c0_i32 : i32, i32
  }
  func.func @transform_1(%arg0: i32) -> (i32, i32) {
    %c0_i32 = arith.constant 0 : i32
    %c0_i32_0 = arith.constant 0 : i32
    return %arg0, %c0_i32 : i32, i32
  }
}

</mosaic_0001>

<llo_original>
// kernel: tpu_custom_call.1
$region0: #{tpu_custom_call.1}
  #allocation0 [shape = 'u32[]', space=smem, size = 0x4, offset = 0x4, fixed_abs, tag = 'smem constant byte address 0x4 - core index']
  #allocation1 [shape = 'u32[144,128]{1,0:T(1,128)}', space=vmem, size = 0x12000, scoped, tag = 'internal scratch']
  %s0 = inlined_call_operand.hbm [shape: f32[8,256], index: 0, kind: input, shape index: {}]
  %s1 = inlined_call_operand.hbm [shape: f32[8,256], index: 1, kind: output, shape index: {}]
  %s2 = sld [smem:[#allocation0]]
  $region18: #{tpu_custom_call.1} parent=0
    _
  %s4 = ssub.s32 1, %s2
  %s5 = scalar_select 0, %s4, %s2
  $region1: #{tpu_custom_call.1} parent=0
    #allocation2 [shape = 'u8[8192]{0}', space=vmem, size = 0x2000, scoped, tag = 'input window, operand 0, single buffered']
    #allocation3 [shape = 's32[1]{0}', space=sflag, size = 0x4, scoped, tag = 'scoped memory for tpu_custom_call.1']
    #allocation4 [shape = 's32[1]{0}', space=sflag, size = 0x4, scoped, tag = 'scoped memory for tpu_custom_call.1']
    #allocation5 [shape = 'u8[8192]{0}', space=vmem, size = 0x2000, scoped, tag = 'output window, operand 0, single buffered']
    %6 = vsyncpa [#allocation3], 0
    %7 = vsyncpa [#allocation4], 0
    // Predicated region
    $region2: #{tpu_custom_call.1} parent=1 // pred_check
      _
    $region3: #{tpu_custom_call.1} parent=1 // pred_check_branch
      %9 = sbr.rel (0) target = $region5
    $region4: #{tpu_custom_call.1} parent=1 // pred_region
      %s11 = ssub.s32 256, 256
      %12 = vsyncadd [#allocation3], %s11
      %s14 = sshll.u32 [#allocation2], 4
      %s15 = int_to_ptr.vmem [resolvable:$true] %s14
      %17 = dma.hbm_to_vmem [thread:$0]  %s0, 256, %s15, [#allocation3]
    $region5: #{tpu_custom_call.1} parent=1 // pred_fallthru
      _
    // Predicated region
    $region6: #{tpu_custom_call.1} parent=1 // pred_check
      _
    $region7: #{tpu_custom_call.1} parent=1 // pred_check_branch
      %19 = sbr.rel (0) target = $region9
    $region8: #{tpu_custom_call.1} parent=1 // pred_region
      %20 = dma.done [#allocation3], 256
    $region9: #{tpu_custom_call.1} parent=1 // pred_fallthru
      _
    %v21 = vld [vmem:[#allocation2] sm:$0xff]
    %v22 = vld [vmem:[#allocation2 + $0x8] sm:$0xff]
    %v23 = vmin.f32 %v21, %v22
    %24 = vmin.xlane.f32.xlu0 %v23
    %v25 = vpop.xlane.xlu0 %24
    %vm26 = vcmp.eq.f32.partialorder %v21, %v25
    %vm27 = vcmp.eq.f32.partialorder %v22, %v25
    %v28 = vsel %vm26, 1, 0
    %v29 = vsel %vm27, 1, 0
    %v30 = vadd.s32 %v28, %v29
    %v31 = vand.u32 %v30, 65535
    %v32 = vshrl.u32 %v30, 16
    %v33 = vcvt.s32.f32 %v31
    %v34 = vcvt.s32.f32 %v32
    %35 = vadd.xlane.f32.xlu0 %v33
    %v36 = vpop.xlane.xlu0 %35
    %37 = vadd.xlane.f32.xlu0 %v34
    %v38 = vpop.xlane.xlu0 %37
    %v39 = vcvt.f32.s32 %v36
    %v40 = vcvt.f32.s32 %v38
    %v41 = vshll.u32 %v40, 16
    %v42 = vadd.s32 %v41, %v39
    %vm43 = vcmp.gt.s32.totalorder %v42, 2
    %v44 = vsel %vm43, %v25, 0.0
    %vm45 = vcmp.gt.s32.totalorder %v42, 3
    %v46 = vsel %vm45, %v25, 0.0
    %v47 = vmax.f32 %v21, %v22
    %48 = vmax.xlane.f32.xlu0 %v47
    %v49 = vpop.xlane.xlu0 %48
    %vm50 = vcmp.eq.f32.partialorder %v21, %v49
    %vm51 = vcmp.eq.f32.partialorder %v22, %v49
    %v52 = vsel %vm50, 1, 0
    %v53 = vsel %vm51, 1, 0
    %v54 = vadd.s32 %v52, %v53
    %v55 = vand.u32 %v54, 65535
    %v56 = vshrl.u32 %v54, 16
    %v57 = vcvt.s32.f32 %v55
    %v58 = vcvt.s32.f32 %v56
    %59 = vadd.xlane.f32.xlu0 %v57
    %v60 = vpop.xlane.xlu0 %59
    %61 = vadd.xlane.f32.xlu0 %v58
    %v62 = vpop.xlane.xlu0 %61
    %v63 = vcvt.f32.s32 %v60
    %v64 = vcvt.f32.s32 %v62
    %v65 = vshll.u32 %v64, 16
    %v66 = vadd.s32 %v65, %v63
    %vm67 = vcmp.gt.s32.totalorder %v66, 3
    %v68 = vsel %vm67, %v49, 0.0
    %vm69 = vcmp.gt.s32.totalorder %v66, 2
    %v70 = vsel %vm69, %v49, 0.0
    %vm71 = vcmp.gt.f32.partialorder %v21, %v25
    %vm72 = vcmp.gt.f32.partialorder %v22, %v25
    %vm73 = vcmp.eq.s32.totalorder %v42, 0
    %v74 = vsel %vm73, 1, 0
    %vm75 = vcmp.eq.s32.totalorder %v74, 1
    %vm76 = vmor %vm71, %vm75
    %vm77 = vmor %vm72, %vm75
    %v78 = vsel %vm76, %v21, inf
    %v79 = vsel %vm77, %v22, inf
    %v80 = vmin.f32 %v78, %v79
    %81 = vmin.xlane.f32.xlu0 %v80
    %v82 = vpop.xlane.xlu0 %81
    %vm83 = vcmp.eq.f32.partialorder %v21, %v82
    %vm84 = vcmp.eq.f32.partialorder %v22, %v82
    %v85 = vsel %vm83, 1, 0
    %v86 = vsel %vm84, 1, 0
    %v87 = vadd.s32 %v85, %v86
    %v88 = vand.u32 %v87, 65535
    %v89 = vshrl.u32 %v87, 16
    %v90 = vcvt.s32.f32 %v88
    %v91 = vcvt.s32.f32 %v89
    %92 = vadd.xlane.f32.xlu0 %v90
    %v93 = vpop.xlane.xlu0 %92
    %94 = vadd.xlane.f32.xlu0 %v91
    %v95 = vpop.xlane.xlu0 %94
    %v96 = vcvt.f32.s32 %v93
    %v97 = vcvt.f32.s32 %v95
    %v98 = vshll.u32 %v97, 16
    %v99 = vadd.s32 %v98, %v96
    %v100 = vadd.s32 %v42, %v99
    %vm101 = vcmp.le.s32.totalorder %v42, 2
    %vm102 = vcmp.gt.s32.totalorder %v100, 2
    %vm103 = vmand %vm101, %vm102
    %v104 = vsel %vm103, %v82, %v44
    %vm105 = vcmp.le.s32.totalorder %v42, 3
    %vm106 = vcmp.gt.s32.totalorder %v100, 3
    %vm107 = vmand %vm105, %vm106
    %v108 = vsel %vm107, %v82, %v46
    %vm109 = vcmp.lt.f32.partialorder %v21, %v49
    %vm110 = vcmp.lt.f32.partialorder %v22, %v49
    %vm111 = vcmp.eq.s32.totalorder %v66, 0
    %v112 = vsel %vm111, 1, 0
    %vm113 = vcmp.eq.s32.totalorder %v112, 1
    %vm114 = vmor %vm109, %vm113
    %vm115 = vmor %vm110, %vm113
    %v116 = vsel %vm114, %v21, -inf
    %v117 = vsel %vm115, %v22, -inf
    %v118 = vmax.f32 %v116, %v117
    %119 = vmax.xlane.f32.xlu0 %v118
    %v120 = vpop.xlane.xlu0 %119
    %vm121 = vcmp.eq.f32.partialorder %v21, %v120
    %vm122 = vcmp.eq.f32.partialorder %v22, %v120
    %v123 = vsel %vm121, 1, 0
    %v124 = vsel %vm122, 1, 0
    %v125 = vadd.s32 %v123, %v124
    %v126 = vand.u32 %v125, 65535
    %v127 = vshrl.u32 %v125, 16
    %v128 = vcvt.s32.f32 %v126
    %v129 = vcvt.s32.f32 %v127
    %130 = vadd.xlane.f32.xlu0 %v128
    %v131 = vpop.xlane.xlu0 %130
    %132 = vadd.xlane.f32.xlu0 %v129
    %v133 = vpop.xlane.xlu0 %132
    %v134 = vcvt.f32.s32 %v131
    %v135 = vcvt.f32.s32 %v133
    %v136 = vshll.u32 %v135, 16
    %v137 = vadd.s32 %v136, %v134
    %v138 = vadd.s32 %v66, %v137
    %vm139 = vcmp.le.s32.totalorder %v66, 3
    %vm140 = vcmp.gt.s32.totalorder %v138, 3
    %vm141 = vmand %vm139, %vm140
    %v142 = vsel %vm141, %v120, %v68
    %vm143 = vcmp.le.s32.totalorder %v66, 2
    %vm144 = vcmp.gt.s32.totalorder %v138, 2
    %vm145 = vmand %vm143, %vm144
    %v146 = vsel %vm145, %v120, %v70
    %vm147 = vcmp.gt.f32.partialorder %v21, %v82
    %vm148 = vcmp.gt.f32.partialorder %v22, %v82
    %vm149 = vcmp.eq.s32.totalorder %v100, 0
    %v150 = vsel %vm149, 1, 0
    %vm151 = vcmp.eq.s32.totalorder %v150, 1
    %vm152 = vmor %vm147, %vm151
    %vm153 = vmor %vm148, %vm151
    %v154 = vsel %vm152, %v21, inf
    %v155 = vsel %vm153, %v22, inf
    %v156 = vmin.f32 %v154, %v155
    %157 = vmin.xlane.f32.xlu0 %v156
    %v158 = vpop.xlane.xlu0 %157
    %vm159 = vcmp.eq.f32.partialorder %v21, %v158
    %vm160 = vcmp.eq.f32.partialorder %v22, %v158
    %v161 = vsel %vm159, 1, 0
    %v162 = vsel %vm160, 1, 0
    %v163 = vadd.s32 %v161, %v162
    %v164 = vand.u32 %v163, 65535
    %v165 = vshrl.u32 %v163, 16
    %v166 = vcvt.s32.f32 %v164
    %v167 = vcvt.s32.f32 %v165
    %168 = vadd.xlane.f32.xlu0 %v166
    %v169 = vpop.xlane.xlu0 %168
    %170 = vadd.xlane.f32.xlu0 %v167
    %v171 = vpop.xlane.xlu0 %170
    %v172 = vcvt.f32.s32 %v169
    %v173 = vcvt.f32.s32 %v171
    %v174 = vshll.u32 %v173, 16
    %v175 = vadd.s32 %v174, %v172
    %v176 = vadd.s32 %v100, %v175
    %vm177 = vcmp.le.s32.totalorder %v100, 2
    %vm178 = vcmp.gt.s32.totalorder %v176, 2
    %vm179 = vmand %vm177, %vm178
    %v180 = vsel %vm179, %v158, %v104
    %vm181 = vcmp.le.s32.totalorder %v100, 3
    %vm182 = vcmp.gt.s32.totalorder %v176, 3
    %vm183 = vmand %vm181, %vm182
    %v184 = vsel %vm183, %v158, %v108
    %vm185 = vcmp.lt.f32.partialorder %v21, %v120
    %vm186 = vcmp.lt.f32.partialorder %v22, %v120
    %vm187 = vcmp.eq.s32.totalorder %v138, 0
    %v188 = vsel %vm187, 1, 0
    %vm189 = vcmp.eq.s32.totalorder %v188, 1
    %vm190 = vmor %vm185, %vm189
    %vm191 = vmor %vm186, %vm189
    %v192 = vsel %vm190, %v21, -inf
    %v193 = vsel %vm191, %v22, -inf
    %v194 = vmax.f32 %v192, %v193
    %195 = vmax.xlane.f32.xlu0 %v194
    %v196 = vpop.xlane.xlu0 %195
    %vm197 = vcmp.eq.f32.partialorder %v21, %v196
    %vm198 = vcmp.eq.f32.partialorder %v22, %v196
    %v199 = vsel %vm197, 1, 0
    %v200 = vsel %vm198, 1, 0
    %v201 = vadd.s32 %v199, %v200
    %v202 = vand.u32 %v201, 65535
    %v203 = vshrl.u32 %v201, 16
    %v204 = vcvt.s32.f32 %v202
    %v205 = vcvt.s32.f32 %v203
    %206 = vadd.xlane.f32.xlu0 %v204
    %v207 = vpop.xlane.xlu0 %206
    %208 = vadd.xlane.f32.xlu0 %v205
    %v209 = vpop.xlane.xlu0 %208
    %v210 = vcvt.f32.s32 %v207
    %v211 = vcvt.f32.s32 %v209
    %v212 = vshll.u32 %v211, 16
    %v213 = vadd.s32 %v212, %v210
    %v214 = vadd.s32 %v138, %v213
    %vm215 = vcmp.le.s32.totalorder %v138, 3
    %vm216 = vcmp.gt.s32.totalorder %v214, 3
    %vm217 = vmand %vm215, %vm216
    %v218 = vsel %vm217, %v196, %v142
    %vm219 = vcmp.le.s32.totalorder %v138, 2
    %vm220 = vcmp.gt.s32.totalorder %v214, 2
    %vm221 = vmand %vm219, %vm220
    %v222 = vsel %vm221, %v196, %v146
    %vm223 = vcmp.gt.f32.partialorder %v21, %v158
    %vm224 = vcmp.gt.f32.partialorder %v22, %v158
    %vm225 = vcmp.eq.s32.totalorder %v176, 0
    %v226 = vsel %vm225, 1, 0
    %vm227 = vcmp.eq.s32.totalorder %v226, 1
    %vm228 = vmor %vm223, %vm227
    %vm229 = vmor %vm224, %vm227
    %v230 = vsel %vm228, %v21, inf
    %v231 = vsel %vm229, %v22, inf
    %v232 = vmin.f32 %v230, %v231
    %233 = vmin.xlane.f32.xlu0 %v232
    %v234 = vpop.xlane.xlu0 %233
    %vm235 = vcmp.eq.f32.partialorder %v21, %v234
    %vm236 = vcmp.eq.f32.partialorder %v22, %v234
    %v237 = vsel %vm235, 1, 0
    %v238 = vsel %vm236, 1, 0
    %v239 = vadd.s32 %v237, %v238
    %v240 = vand.u32 %v239, 65535
    %v241 = vshrl.u32 %v239, 16
    %v242 = vcvt.s32.f32 %v240
    %v243 = vcvt.s32.f32 %v241
    %244 = vadd.xlane.f32.xlu0 %v242
    %v245 = vpop.xlane.xlu0 %244
    %246 = vadd.xlane.f32.xlu0 %v243
    %v247 = vpop.xlane.xlu0 %246
    %v248 = vcvt.f32.s32 %v245
    %v249 = vcvt.f32.s32 %v247
    %v250 = vshll.u32 %v249, 16
    %v251 = vadd.s32 %v250, %v248
    %v252 = vadd.s32 %v176, %v251
    %vm253 = vcmp.le.s32.totalorder %v176, 2
    %vm254 = vcmp.gt.s32.totalorder %v252, 2
    %vm255 = vmand %vm253, %vm254
    %v256 = vsel %vm255, %v234, %v180
    %vm257 = vcmp.le.s32.totalorder %v176, 3
    %vm258 = vcmp.gt.s32.totalorder %v252, 3
    %vm259 = vmand %vm257, %vm258
    %v260 = vsel %vm259, %v234, %v184
    %vm261 = vcmp.lt.f32.partialorder %v21, %v196
    %vm262 = vcmp.lt.f32.partialorder %v22, %v196
    %vm263 = vcmp.eq.s32.totalorder %v214, 0
    %v264 = vsel %vm263, 1, 0
    %vm265 = vcmp.eq.s32.totalorder %v264, 1
    %vm266 = vmor %vm261, %vm265
    %vm267 = vmor %vm262, %vm265
    %v268 = vsel %vm266, %v21, -inf
    %v269 = vsel %vm267, %v22, -inf
    %v270 = vmax.f32 %v268, %v269
    %271 = vmax.xlane.f32.xlu0 %v270
    %v272 = vpop.xlane.xlu0 %271
    %vm273 = vcmp.eq.f32.partialorder %v21, %v272
    %vm274 = vcmp.eq.f32.partialorder %v22, %v272
    %v275 = vsel %vm273, 1, 0
    %v276 = vsel %vm274, 1, 0
    %v277 = vadd.s32 %v275, %v276
    %v278 = vand.u32 %v277, 65535
    %v279 = vshrl.u32 %v277, 16
    %v280 = vcvt.s32.f32 %v278
    %v281 = vcvt.s32.f32 %v279
    %282 = vadd.xlane.f32.xlu0 %v280
    %v283 = vpop.xlane.xlu0 %282
    %284 = vadd.xlane.f32.xlu0 %v281
    %v285 = vpop.xlane.xlu0 %284
    %v286 = vcvt.f32.s32 %v283
    %v287 = vcvt.f32.s32 %v285
    %v288 = vshll.u32 %v287, 16
    %v289 = vadd.s32 %v288, %v286
    %v290 = vadd.s32 %v214, %v289
    %vm291 = vcmp.le.s32.totalorder %v214, 3
    %vm292 = vcmp.gt.s32.totalorder %v290, 3
    %vm293 = vmand %vm291, %vm292
    %v294 = vsel %vm293, %v272, %v218
    %vm295 = vcmp.le.s32.totalorder %v214, 2
    %vm296 = vcmp.gt.s32.totalorder %v290, 2
    %vm297 = vmand %vm295, %vm296
    %v298 = vsel %vm297, %v272, %v222
    %v299 = vsub.f32 %v260, %v256
    %v300 = vmul.f32 %v299, 0.55
    %v301 = vadd.f32 %v256, %v300
    %v302 = vsub.f32 %v298, %v294
    %v303 = vmul.f32 %v302, 0.45
    %v304 = vadd.f32 %v294, %v303
    %v305 = vmax.f32 %v301, %v21
    %v306 = vmax.f32 %v301, %v22
    %v307 = vmin.f32 %v304, %v305
    %v308 = vmin.f32 %v304, %v306
    %v309 = vsub.f32 %v304, %v301
    %v310 = vadd.f32 %v309, 1e-08
    %v311 = vrcp.pop %v310
    %v312 = vmul.f32 %v310, %v311
    %v313 = vsub.f32 2.0, %v312
    %v314 = vmul.f32 %v311, %v313
    %v315 = vmul.f32 %v310, %v314
    %v316 = vsub.f32 2.0, %v315
    %v317 = vmul.f32 %v314, %v316
    %v318 = vsub.f32 %v307, %v301
    %v319 = vsub.f32 %v308, %v301
    %v320 = vmul.f32 %v318, %v317
    %v321 = vmul.f32 %v319, %v317
    %322 = vst [vmem:[#allocation5] sm:$0xff] %v320
    %323 = vst [vmem:[#allocation5 + $0x8] sm:$0xff] %v321
    // Predicated region
    $region10: #{tpu_custom_call.1} parent=1 // pred_check
      _
    $region11: #{tpu_custom_call.1} parent=1 // pred_check_branch
      %325 = sbr.rel (0) target = $region13
    $region12: #{tpu_custom_call.1} parent=1 // pred_region
      %s327 = ssub.s32 256, 256
      %328 = vsyncadd [#allocation4], %s327
      %s330 = sshll.u32 [#allocation5], 4
      %s331 = int_to_ptr.vmem [resolvable:$true] %s330
      %333 = dma.vmem_to_hbm [thread:$0]  %s331, 256, %s1, [#allocation4]
    $region13: #{tpu_custom_call.1} parent=1 // pred_fallthru
      _
    // Predicated region
    $region14: #{tpu_custom_call.1} parent=1 // pred_check
      _
    $region15: #{tpu_custom_call.1} parent=1 // pred_check_branch
      %335 = sbr.rel (0) target = $region17
    $region16: #{tpu_custom_call.1} parent=1 // pred_region
      %336 = dma.done [#allocation4], 256
    $region17: #{tpu_custom_call.1} parent=1 // pred_fallthru
      _
    %337 = vsyncpa [#allocation3], 1
    %338 = vsyncpa [#allocation4], 1

</llo_original>
